<compile_context>
chip_gen: v7x
topology: tpu7x:2x2x1
jax: 0.10.0
libtpu: 0.0.40
codegen_flags: <defaults>
</compile_context>

<pallas_src>
import functools

import jax
import jax.numpy as jnp
from jax import lax
from jax.experimental import pallas as pl
from jax.experimental.pallas import tpu as pltpu


# Residency budget for the fused path: safe on every generation
# (v5e scoped default 16 MiB can be raised; v7x physical VMEM is 64 MiB).
_FUSED_RESIDENCY_BUDGET = 24 * 1024 * 1024
_VMEM_LIMIT_BYTES = 32 * 1024 * 1024


def _pick_tile(dim: int, target: int, granularity: int) -> int:
    """Largest multiple of `granularity` that divides `dim` and is <= target.

    Falls back to the full dim (always legal: block == full array extent).
    """
    if dim <= target:
        return dim
    t = (target // granularity) * granularity
    while t >= granularity:
        if dim % t == 0:
            return t
        t -= granularity
    return dim


# ---------------------------------------------------------------------------
# Path A: fully fused forward, everything resident in VMEM (small shapes).
# ---------------------------------------------------------------------------
def _fused_kernel(x_ref, w1_ref, w2_ref, o_ref):
    # hidden = x @ w1.T  : contract last dims of both operands (no transpose).
    hidden = lax.dot_general(
        x_ref[...],
        w1_ref[...],
        dimension_numbers=(((1,), (1,)), ((), ())),
        preferred_element_type=jnp.float32,
    )
    # logits = hidden @ w2.T
    logits = lax.dot_general(
        hidden,
        w2_ref[...],
        dimension_numbers=(((1,), (1,)), ((), ())),
        preferred_element_type=jnp.float32,
    )
    # softmax over the vocab (last) dim, all in VMEM.
    m = jnp.max(logits, axis=-1, keepdims=True)
    e = jnp.exp(logits - m)
    s = jnp.sum(e, axis=-1, keepdims=True)
    o_ref[...] = (e / s).astype(o_ref.dtype)


def _fused_forward(x, w1, w2):
    B, V = x.shape
    H = w1.shape[0]
    return pl.pallas_call(
        _fused_kernel,
        out_shape=jax.ShapeDtypeStruct((B, V), jnp.float32),
        grid=(1,),
        in_specs=[
            pl.BlockSpec((B, V), lambda i: (0, 0)),  # x
            pl.BlockSpec((H, V), lambda i: (0, 0)),  # fc1.weight
            pl.BlockSpec((V, H), lambda i: (0, 0)),  # fc2.weight
        ],
        out_specs=pl.BlockSpec((B, V), lambda i: (0, 0)),
        compiler_params=pltpu.CompilerParams(
            dimension_semantics=("arbitrary",),
            vmem_limit_bytes=_VMEM_LIMIT_BYTES,
        ),
    )(x, w1, w2)


# ---------------------------------------------------------------------------
# Path B: large-shape fallback.
#   fc1: tiled y = x @ w.T, accumulating directly into the resident f32 output.
#   fc2: vocab-tiled matmul fused with softmax (logits never leave VMEM).
# ---------------------------------------------------------------------------
def _linear_nt_kernel(x_ref, w_ref, o_ref):
    """x_ref: (M, TK)  w_ref: (TN, TK)  o_ref: (M, TN) f32, resident over k."""

    @pl.when(pl.program_id(1) == 0)
    def _init():
        o_ref[...] = jnp.zeros_like(o_ref)

    o_ref[...] += lax.dot_general(
        x_ref[...],
        w_ref[...],
        dimension_numbers=(((1,), (1,)), ((), ())),
        preferred_element_type=jnp.float32,
    )


def _linear_nt(x, w, *, tn_target=512, tk_target=512):
    """y = x @ w.T with w of shape (N, K) (PyTorch nn.Linear weight layout)."""
    M, K = x.shape
    N, K2 = w.shape
    assert K == K2, (x.shape, w.shape)

    tn = _pick_tile(N, tn_target, 128)
    tk = _pick_tile(K, tk_target, 128)
    return pl.pallas_call(
        _linear_nt_kernel,
        out_shape=jax.ShapeDtypeStruct((M, N), jnp.float32),
        grid=(N // tn, K // tk),
        in_specs=[
            pl.BlockSpec((M, tk), lambda j, k: (0, k)),   # activations
            pl.BlockSpec((tn, tk), lambda j, k: (j, k)),  # weight tiles
        ],
        out_specs=pl.BlockSpec((M, tn), lambda j, k: (0, j)),
        compiler_params=pltpu.CompilerParams(
            dimension_semantics=("parallel", "arbitrary"),
            vmem_limit_bytes=_VMEM_LIMIT_BYTES,
        ),
    )(x, w)


def _fc2_softmax_kernel(h_ref, w_ref, o_ref, *, tv):
    """h_ref: (B, H)  w_ref: (TV, H)  o_ref: (B, V) f32, resident over vocab."""
    j = pl.program_id(0)

    logits = lax.dot_general(
        h_ref[...],
        w_ref[...],
        dimension_numbers=(((1,), (1,)), ((), ())),
        preferred_element_type=jnp.float32,
    )
    start = j * tv
    if tv % 128 == 0:
        start = pl.multiple_of(start, 128)
    o_ref[:, pl.ds(start, tv)] = logits

    # On the last vocab tile the full (B, V) logits are resident: softmax
    # in-place, so raw logits never hit HBM.
    @pl.when(j == pl.num_programs(0) - 1)
    def _finalize():
        full = o_ref[...]
        m = jnp.max(full, axis=-1, keepdims=True)
        e = jnp.exp(full - m)
        s = jnp.sum(e, axis=-1, keepdims=True)
        o_ref[...] = (e / s).astype(o_ref.dtype)


def _fc2_softmax(hidden, w2, *, tv_target=512):
    B, H = hidden.shape
    V, H2 = w2.shape
    assert H == H2, (hidden.shape, w2.shape)

    tv = _pick_tile(V, tv_target, 128)
    kernel = functools.partial(_fc2_softmax_kernel, tv=tv)
    return pl.pallas_call(
        kernel,
        out_shape=jax.ShapeDtypeStruct((B, V), jnp.float32),
        grid=(V // tv,),
        in_specs=[
            pl.BlockSpec((B, H), lambda j: (0, 0)),   # hidden, fully resident
            pl.BlockSpec((tv, H), lambda j: (j, 0)),  # streamed weight tiles
        ],
        out_specs=pl.BlockSpec((B, V), lambda j: (0, 0)),  # resident (B, V)
        compiler_params=pltpu.CompilerParams(
            dimension_semantics=("arbitrary",),
            vmem_limit_bytes=_VMEM_LIMIT_BYTES,
        ),
    )(hidden, w2)


# ---------------------------------------------------------------------------
# Public forward
# ---------------------------------------------------------------------------
def word2word_forward(x, fc1_weight, fc2_weight, *, force_tiled=False):
    """softmax(fc2(fc1(x))) with bias-free linears in PyTorch weight layout."""
    B, V = x.shape
    H, V2 = fc1_weight.shape
    V3, H2 = fc2_weight.shape
    assert V == V2 and V == V3 and H == H2, (x.shape, fc1_weight.shape, fc2_weight.shape)

    itemsize = 4  # f32
    resident_bytes = itemsize * (B * V       # x
                                 + H * V     # fc1.weight
                                 + V * H     # fc2.weight
                                 + B * H     # hidden
                                 + 2 * B * V)  # logits + output
    if not force_tiled and resident_bytes <= _FUSED_RESIDENCY_BUDGET:
        return _fused_forward(x, fc1_weight, fc2_weight)

    hidden = _linear_nt(x, fc1_weight)       # (B, H)
    return _fc2_softmax(hidden, fc2_weight)  # (B, V), softmax fused in


if __name__ == "__main__":
    # Small shapes consistent with the module: input_dim (= vocab) 256,
    # hidden_dim 128, batch of 8 context vectors.
    input_dim = 256
    hidden_dim = 128
    batch = 8

    key = jax.random.PRNGKey(0)
    k_x, k_w1, k_w2 = jax.random.split(key, 3)

    # nn.Linear(input_dim, hidden_dim, bias=False).weight -> (hidden_dim, input_dim)
    w1 = jax.random.normal(k_w1, (hidden_dim, input_dim), jnp.float32) * 0.1
    # nn.Linear(hidden_dim, input_dim, bias=False).weight -> (input_dim, hidden_dim)
    w2 = jax.random.normal(k_w2, (input_dim, hidden_dim), jnp.float32) * 0.1
    x = jax.random.normal(k_x, (batch, input_dim), jnp.float32)

    # Pure-JAX reference of the PyTorch forward.
    hidden_ref = jnp.dot(x, w1.T, precision=lax.Precision.HIGHEST)
    logits_ref = jnp.dot(hidden_ref, w2.T, precision=lax.Precision.HIGHEST)
    ref = jax.nn.softmax(logits_ref, axis=-1)

    # Path A: fused all-VMEM kernel (the one used at the module's real shapes).
    probs = jax.block_until_ready(word2word_forward(x, w1, w2))
    assert probs.shape == (batch, input_dim)
    assert jnp.allclose(probs, ref, rtol=1e-3, atol=1e-5), "fused path mismatch"

    # Path B: large-shape fallback (tiled fc1 + fc2-with-fused-softmax),
    # exercised here at the same small shapes to validate both code paths.
    probs_tiled = jax.block_until_ready(
        word2word_forward(x, w1, w2, force_tiled=True))
    assert jnp.allclose(probs_tiled, ref, rtol=1e-3, atol=1e-5), "tiled path mismatch"

    # TODO(synk): train() (Adam + CrossEntropyLoss loop), _embeddings() and
    # get_vector() are host-side training/introspection utilities, not part of
    # the forward hot path, and are not kernelized.
    print("KERNEL_OK")
</pallas_src>

<mosaic_0001>
module attributes {stable_mosaic.version = 11 : i64} {
  func.func @_fused_kernel(%arg0: i32, %arg1: memref<8x256xf32, #tpu.memory_space<vmem>>, %arg2: memref<128x256xf32, #tpu.memory_space<vmem>>, %arg3: memref<256x128xf32, #tpu.memory_space<vmem>>, %arg4: memref<8x256xf32, #tpu.memory_space<vmem>>) attributes {dimension_semantics = [#tpu.dimension_semantics<arbitrary>], iteration_bounds = array<i64: 1>, scalar_prefetch = 0 : i64, scratch_operands = 0 : i64, tpu.core_type = #tpu.core_type<tc>, window_params = [{pipeline_mode = #tpu.pipeline_mode<synchronous>, transform_indices = @transform_0, window_bounds = array<i64: 8, 256>}, {pipeline_mode = #tpu.pipeline_mode<synchronous>, transform_indices = @transform_1, window_bounds = array<i64: 128, 256>}, {pipeline_mode = #tpu.pipeline_mode<synchronous>, transform_indices = @transform_2, window_bounds = array<i64: 256, 128>}, {pipeline_mode = #tpu.pipeline_mode<synchronous>, transform_indices = @transform_3, window_bounds = array<i64: 8, 256>}]} {
    %c0 = arith.constant 0 : index
    %c0_0 = arith.constant 0 : index
    %0 = vector.load %arg1[%c0, %c0_0] : memref<8x256xf32, #tpu.memory_space<vmem>>, vector<8x256xf32>
    %c0_1 = arith.constant 0 : index
    %c0_2 = arith.constant 0 : index
    %1 = vector.load %arg2[%c0_1, %c0_2] : memref<128x256xf32, #tpu.memory_space<vmem>>, vector<128x256xf32>
    %cst = arith.constant dense<0.000000e+00> : vector<8x128xf32>
    %2 = tpu.matmul %0, %1, %cst {dimension_numbers = #tpu.dot_dimension_numbers<[1], [1], [0], [0], [0, 0, 1, 0], [], []>} : vector<8x256xf32>, vector<128x256xf32>, vector<8x128xf32> -> vector<8x128xf32>
    %c0_3 = arith.constant 0 : index
    %c0_4 = arith.constant 0 : index
    %3 = vector.load %arg3[%c0_3, %c0_4] : memref<256x128xf32, #tpu.memory_space<vmem>>, vector<256x128xf32>
    %cst_5 = arith.constant dense<0.000000e+00> : vector<8x256xf32>
    %4 = tpu.matmul %2, %3, %cst_5 {dimension_numbers = #tpu.dot_dimension_numbers<[1], [1], [0], [0], [0, 0, 1, 0], [], []>} : vector<8x128xf32>, vector<256x128xf32>, vector<8x256xf32> -> vector<8x256xf32>
    %cst_6 = arith.constant dense<0xFF800000> : vector<8xf32>
    %5 = vector.multi_reduction <maximumf>, %4, %cst_6 [1] : vector<8x256xf32> to vector<8xf32>
    %6 = vector.shape_cast %5 : vector<8xf32> to vector<8x1xf32>
    %7 = vector.broadcast %6 : vector<8x1xf32> to vector<8x256xf32>
    %8 = arith.subf %4, %7 : vector<8x256xf32>
    %9 = math.exp %8 : vector<8x256xf32>
    %cst_7 = arith.constant dense<0.000000e+00> : vector<8xf32>
    %10 = vector.multi_reduction <add>, %9, %cst_7 [1] : vector<8x256xf32> to vector<8xf32>
    %11 = vector.shape_cast %10 : vector<8xf32> to vector<8x1xf32>
    %12 = vector.broadcast %11 : vector<8x1xf32> to vector<8x256xf32>
    %13 = arith.divf %9, %12 : vector<8x256xf32>
    %c0_8 = arith.constant 0 : index
    %c0_9 = arith.constant 0 : index
    %14 = vector.load %arg4[%c0_8, %c0_9] : memref<8x256xf32, #tpu.memory_space<vmem>>, vector<8x256xf32>
    tpu.vector_store %arg4[%c0_8, %c0_9], %13 {strides = array<i32>} : memref<8x256xf32, #tpu.memory_space<vmem>>, vector<8x256xf32>,
    return
  }
  func.func @transform_0(%arg0: i32) -> (i32, i32) {
    %c0_i32 = arith.constant 0 : i32
    %c0_i32_0 = arith.constant 0 : i32
    %c0_i32_1 = arith.constant 0 : i32
    return %c0_i32, %c0_i32_0 : i32, i32
  }
  func.func @transform_1(%arg0: i32) -> (i32, i32) {
    %c0_i32 = arith.constant 0 : i32
    %c0_i32_0 = arith.constant 0 : i32
    %c0_i32_1 = arith.constant 0 : i32
    return %c0_i32, %c0_i32_0 : i32, i32
  }
  func.func @transform_2(%arg0: i32) -> (i32, i32) {
    %c0_i32 = arith.constant 0 : i32
    %c0_i32_0 = arith.constant 0 : i32
    %c0_i32_1 = arith.constant 0 : i32
    return %c0_i32, %c0_i32_0 : i32, i32
  }
  func.func @transform_3(%arg0: i32) -> (i32, i32) {
    %c0_i32 = arith.constant 0 : i32
    %c0_i32_0 = arith.constant 0 : i32
    %c0_i32_1 = arith.constant 0 : i32
    return %c0_i32, %c0_i32_0 : i32, i32
  }
}

</mosaic_0001>

<llo_original>
// kernel: tpu_custom_call.1
$region0: #{tpu_custom_call.1}
  #allocation0 [shape = 'u32[]', space=smem, size = 0x4, offset = 0x4, fixed_abs, tag = 'smem constant byte address 0x4 - core index']
  #allocation1 [shape = 'u32[144,128]{1,0:T(1,128)}', space=vmem, size = 0x12000, scoped, tag = 'internal scratch']
  %s0 = inlined_call_operand.hbm [shape: f32[8,256], index: 0, kind: input, shape index: {}]
  %s1 = inlined_call_operand.hbm [shape: f32[128,256], index: 1, kind: input, shape index: {}]
  %s2 = inlined_call_operand.hbm [shape: f32[256,128], index: 2, kind: input, shape index: {}]
  %s3 = inlined_call_operand.hbm [shape: f32[8,256], index: 3, kind: output, shape index: {}]
  %s4 = sld [smem:[#allocation0]]
  $region34: #{tpu_custom_call.1} parent=0
    _
  %s6 = ssub.s32 1, %s4
  %s7 = scalar_select 0, %s6, %s4
  $region1: #{tpu_custom_call.1} parent=0
    #allocation2 [shape = 'u8[8192]{0}', space=vmem, size = 0x2000, scoped, tag = 'input window, operand 0, single buffered']
    #allocation3 [shape = 's32[1]{0}', space=sflag, size = 0x4, scoped, tag = 'scoped memory for tpu_custom_call.1']
    #allocation4 [shape = 's32[1]{0}', space=sflag, size = 0x4, scoped, tag = 'scoped memory for tpu_custom_call.1']
    #allocation5 [shape = 'u8[131072]{0}', space=vmem, size = 0x20000, scoped, tag = 'input window, operand 1, single buffered']
    #allocation6 [shape = 's32[1]{0}', space=sflag, size = 0x4, scoped, tag = 'scoped memory for tpu_custom_call.1']
    #allocation7 [shape = 'u8[131072]{0}', space=vmem, size = 0x20000, scoped, tag = 'input window, operand 2, single buffered']
    #allocation8 [shape = 'u8[8192]{0}', space=vmem, size = 0x2000, scoped, tag = 'output window, operand 0, single buffered']
    %8 = vsyncpa [#allocation3], 0
    %9 = vsyncpa [#allocation6], 0
    %10 = vsyncpa [#allocation4], 0
    // Predicated region
    $region2: #{tpu_custom_call.1} parent=1 // pred_check
      _
    $region3: #{tpu_custom_call.1} parent=1 // pred_check_branch
      %12 = sbr.rel (0) target = $region5
    $region4: #{tpu_custom_call.1} parent=1 // pred_region
      %s14 = ssub.s32 256, 256
      %15 = vsyncadd [#allocation3], %s14
      %s17 = sshll.u32 [#allocation2], 4
      %s18 = int_to_ptr.vmem [resolvable:$true] %s17
      %20 = dma.hbm_to_vmem [thread:$0]  %s0, 256, %s18, [#allocation3]
    $region5: #{tpu_custom_call.1} parent=1 // pred_fallthru
      _
    // Predicated region
    $region6: #{tpu_custom_call.1} parent=1 // pred_check
      _
    $region7: #{tpu_custom_call.1} parent=1 // pred_check_branch
      %22 = sbr.rel (0) target = $region9
    $region8: #{tpu_custom_call.1} parent=1 // pred_region
      %s24 = ssub.s32 4096, 4096
      %25 = vsyncadd [#allocation6], %s24
      %s26 = sshll.u32 [#allocation5], 4
      %s27 = int_to_ptr.vmem [resolvable:$true] %s26
      %32 = dma.hbm_to_vmem [thread:$0]  %s1, 4096, %s27, [#allocation6], 256, 256, 16
    $region9: #{tpu_custom_call.1} parent=1 // pred_fallthru
      _
    // Predicated region
    $region10: #{tpu_custom_call.1} parent=1 // pred_check
      _
    $region11: #{tpu_custom_call.1} parent=1 // pred_check_branch
      %34 = sbr.rel (0) target = $region13
    $region12: #{tpu_custom_call.1} parent=1 // pred_region
      %s36 = ssub.s32 4096, 4096
      %37 = vsyncadd [#allocation6], %s36
      %s38 = sshll.u32 [#allocation7], 4
      %s39 = int_to_ptr.vmem [resolvable:$true] %s38
      %44 = dma.hbm_to_vmem [thread:$0]  %s2, 4096, %s39, [#allocation6], 128, 128, 8
    $region13: #{tpu_custom_call.1} parent=1 // pred_fallthru
      _
    // Predicated region
    $region14: #{tpu_custom_call.1} parent=1 // pred_check
      _
    $region15: #{tpu_custom_call.1} parent=1 // pred_check_branch
      %46 = sbr.rel (0) target = $region17
    $region16: #{tpu_custom_call.1} parent=1 // pred_region
      %47 = dma.done [#allocation3], 256
    $region17: #{tpu_custom_call.1} parent=1 // pred_fallthru
      _
    // Predicated region
    $region18: #{tpu_custom_call.1} parent=1 // pred_check
      _
    $region19: #{tpu_custom_call.1} parent=1 // pred_check_branch
      %49 = sbr.rel (0) target = $region21
    $region20: #{tpu_custom_call.1} parent=1 // pred_region
      %50 = dma.done [#allocation6], 4096
    $region21: #{tpu_custom_call.1} parent=1 // pred_fallthru
      _
    // Predicated region
    $region22: #{tpu_custom_call.1} parent=1 // pred_check
      _
    $region23: #{tpu_custom_call.1} parent=1 // pred_check_branch
      %52 = sbr.rel (0) target = $region25
    $region24: #{tpu_custom_call.1} parent=1 // pred_region
      %53 = dma.done [#allocation6], 4096
    $region25: #{tpu_custom_call.1} parent=1 // pred_fallthru
      _
    %v54 = vld [vmem:[#allocation2] sm:$0xff]
    %v55 = vld [vmem:[#allocation2 + $0x8] sm:$0xff]
    %v56 = vld [vmem:[#allocation5] sm:$0xff]
    %v57 = vld [vmem:[#allocation5 + $0x8] sm:$0xff]
    %v58 = vld [vmem:[#allocation5 + $0x10] sm:$0xff]
    %v59 = vld [vmem:[#allocation5 + $0x18] sm:$0xff]
    %v60 = vld [vmem:[#allocation5 + $0x20] sm:$0xff]
    %v61 = vld [vmem:[#allocation5 + $0x28] sm:$0xff]
    %v62 = vld [vmem:[#allocation5 + $0x30] sm:$0xff]
    %v63 = vld [vmem:[#allocation5 + $0x38] sm:$0xff]
    %v64 = vld [vmem:[#allocation5 + $0x40] sm:$0xff]
    %v65 = vld [vmem:[#allocation5 + $0x48] sm:$0xff]
    %v66 = vld [vmem:[#allocation5 + $0x50] sm:$0xff]
    %v67 = vld [vmem:[#allocation5 + $0x58] sm:$0xff]
    %v68 = vld [vmem:[#allocation5 + $0x60] sm:$0xff]
    %v69 = vld [vmem:[#allocation5 + $0x68] sm:$0xff]
    %v70 = vld [vmem:[#allocation5 + $0x70] sm:$0xff]
    %v71 = vld [vmem:[#allocation5 + $0x78] sm:$0xff]
    %v72 = vld [vmem:[#allocation5 + $0x80] sm:$0xff]
    %v73 = vld [vmem:[#allocation5 + $0x88] sm:$0xff]
    %v74 = vld [vmem:[#allocation5 + $0x90] sm:$0xff]
    %v75 = vld [vmem:[#allocation5 + $0x98] sm:$0xff]
    %v76 = vld [vmem:[#allocation5 + $0xa0] sm:$0xff]
    %v77 = vld [vmem:[#allocation5 + $0xa8] sm:$0xff]
    %v78 = vld [vmem:[#allocation5 + $0xb0] sm:$0xff]
    %v79 = vld [vmem:[#allocation5 + $0xb8] sm:$0xff]
    %v80 = vld [vmem:[#allocation5 + $0xc0] sm:$0xff]
    %v81 = vld [vmem:[#allocation5 + $0xc8] sm:$0xff]
    %v82 = vld [vmem:[#allocation5 + $0xd0] sm:$0xff]
    %v83 = vld [vmem:[#allocation5 + $0xd8] sm:$0xff]
    %v84 = vld [vmem:[#allocation5 + $0xe0] sm:$0xff]
    %v85 = vld [vmem:[#allocation5 + $0xe8] sm:$0xff]
    %v86 = vld [vmem:[#allocation5 + $0xf0] sm:$0xff]
    %v87 = vld [vmem:[#allocation5 + $0xf8] sm:$0xff]
    %88 = vmatprep.subr.mxu0 %v57
    %89 = vmatpush1.xpose.msra.mxu0 %v56
    %90 = vmatprep.subr.mxu0 %v59
    %91 = vmatpush1.xpose.msra.mxu0 %v58
    %92 = vmatprep.subr.mxu0 %v61
    %93 = vmatpush1.xpose.msra.mxu0 %v60
    %94 = vmatprep.subr.mxu0 %v63
    %95 = vmatpush1.xpose.msra.mxu0 %v62
    %96 = vmatprep.subr.mxu0 %v65
    %97 = vmatpush1.xpose.msra.mxu0 %v64
    %98 = vmatprep.subr.mxu0 %v67
    %99 = vmatpush1.xpose.msra.mxu0 %v66
    %100 = vmatprep.subr.mxu0 %v69
    %101 = vmatpush1.xpose.msra.mxu0 %v68
    %102 = vmatprep.subr.mxu0 %v71
    %103 = vmatpush1.xpose.msra.mxu0 %v70
    %104 = vmatprep.subr.mxu0 %v73
    %105 = vmatpush1.xpose.msra.mxu0 %v72
    %106 = vmatprep.subr.mxu0 %v75
    %107 = vmatpush1.xpose.msra.mxu0 %v74
    %108 = vmatprep.subr.mxu0 %v77
    %109 = vmatpush1.xpose.msra.mxu0 %v76
    %110 = vmatprep.subr.mxu0 %v79
    %111 = vmatpush1.xpose.msra.mxu0 %v78
    %112 = vmatprep.subr.mxu0 %v81
    %113 = vmatpush1.xpose.msra.mxu0 %v80
    %114 = vmatprep.subr.mxu0 %v83
    %115 = vmatpush1.xpose.msra.mxu0 %v82
    %116 = vmatprep.subr.mxu0 %v85
    %117 = vmatpush1.xpose.msra.mxu0 %v84
    %118 = vmatprep.subr.mxu0 %v87
    %119 = vmatpush1.xpose.msra.mxu0 %v86
    %120 = vmatprep.subr.mxu0 0.0
    %121 = vmatpush1.xpose.msra.mxu0 0.0
    %122 = vmatprep.subr.mxu0 0.0
    %123 = vmatpush1.xpose.msra.mxu0 0.0
    %124 = vmatprep.subr.mxu0 0.0
    %125 = vmatpush1.xpose.msra.mxu0 0.0
    %126 = vmatprep.subr.mxu0 0.0
    %127 = vmatpush1.xpose.msra.mxu0 0.0
    %128 = vmatprep.subr.mxu0 0.0
    %129 = vmatpush1.xpose.msra.mxu0 0.0
    %130 = vmatprep.subr.mxu0 0.0
    %131 = vmatpush1.xpose.msra.mxu0 0.0
    %132 = vmatprep.subr.mxu0 0.0
    %133 = vmatpush1.xpose.msra.mxu0 0.0
    %134 = vmatprep.subr.mxu0 0.0
    %135 = vmatpush1.xpose.msra.mxu0 0.0
    %136 = vmatprep.subr.mxu0 0.0
    %137 = vmatpush1.xpose.msra.mxu0 0.0
    %138 = vmatprep.subr.mxu0 0.0
    %139 = vmatpush1.xpose.msra.mxu0 0.0
    %140 = vmatprep.subr.mxu0 0.0
    %141 = vmatpush1.xpose.msra.mxu0 0.0
    %142 = vmatprep.subr.mxu0 0.0
    %143 = vmatpush1.xpose.msra.mxu0 0.0
    %144 = vmatprep.subr.mxu0 0.0
    %145 = vmatpush1.xpose.msra.mxu0 0.0
    %146 = vmatprep.subr.mxu0 0.0
    %147 = vmatpush1.xpose.msra.mxu0 0.0
    %148 = vmatprep.subr.mxu0 0.0
    %149 = vmatpush1.xpose.msra.mxu0 0.0
    %150 = vmatprep.subr.mxu0 0.0
    %151 = vmatpush1.xpose.msra.mxu0 0.0
    %152 = vmatprep.mubr.f32.mxu0 %v55
    %153 = vmatmul.mubr.f32.gmra.mrb[0].mxu0 %v54
    %v154 = vpop.f32.mrb[0].mxu0
    %v155 = vadd.f32 0.0, %v154
    %v156 = vpop.f32.mrb[0].mxu0
    %157 = vdwg.mxu0
    %v158 = vld [vmem:[#allocation7] sm:$0xff]
    %v159 = vld [vmem:[#allocation7 + $0x8] sm:$0xff]
    %v160 = vld [vmem:[#allocation7 + $0x10] sm:$0xff]
    %v161 = vld [vmem:[#allocation7 + $0x18] sm:$0xff]
    %v162 = vld [vmem:[#allocation7 + $0x20] sm:$0xff]
    %v163 = vld [vmem:[#allocation7 + $0x28] sm:$0xff]
    %v164 = vld [vmem:[#allocation7 + $0x30] sm:$0xff]
    %v165 = vld [vmem:[#allocation7 + $0x38] sm:$0xff]
    %v166 = vld [vmem:[#allocation7 + $0x40] sm:$0xff]
    %v167 = vld [vmem:[#allocation7 + $0x48] sm:$0xff]
    %v168 = vld [vmem:[#allocation7 + $0x50] sm:$0xff]
    %v169 = vld [vmem:[#allocation7 + $0x58] sm:$0xff]
    %v170 = vld [vmem:[#allocation7 + $0x60] sm:$0xff]
    %v171 = vld [vmem:[#allocation7 + $0x68] sm:$0xff]
    %v172 = vld [vmem:[#allocation7 + $0x70] sm:$0xff]
    %v173 = vld [vmem:[#allocation7 + $0x78] sm:$0xff]
    %v174 = vld [vmem:[#allocation7 + $0x80] sm:$0xff]
    %v175 = vld [vmem:[#allocation7 + $0x88] sm:$0xff]
    %v176 = vld [vmem:[#allocation7 + $0x90] sm:$0xff]
    %v177 = vld [vmem:[#allocation7 + $0x98] sm:$0xff]
    %v178 = vld [vmem:[#allocation7 + $0xa0] sm:$0xff]
    %v179 = vld [vmem:[#allocation7 + $0xa8] sm:$0xff]
    %v180 = vld [vmem:[#allocation7 + $0xb0] sm:$0xff]
    %v181 = vld [vmem:[#allocation7 + $0xb8] sm:$0xff]
    %v182 = vld [vmem:[#allocation7 + $0xc0] sm:$0xff]
    %v183 = vld [vmem:[#allocation7 + $0xc8] sm:$0xff]
    %v184 = vld [vmem:[#allocation7 + $0xd0] sm:$0xff]
    %v185 = vld [vmem:[#allocation7 + $0xd8] sm:$0xff]
    %v186 = vld [vmem:[#allocation7 + $0xe0] sm:$0xff]
    %v187 = vld [vmem:[#allocation7 + $0xe8] sm:$0xff]
    %v188 = vld [vmem:[#allocation7 + $0xf0] sm:$0xff]
    %v189 = vld [vmem:[#allocation7 + $0xf8] sm:$0xff]
    %190 = vmatprep.subr.mxu0 0.0
    %191 = vmatpush1.xpose.msra.mxu0 %v158
    %192 = vmatprep.subr.mxu0 0.0
    %193 = vmatpush1.xpose.msra.mxu0 %v159
    %194 = vmatprep.subr.mxu0 0.0
    %195 = vmatpush1.xpose.msra.mxu0 %v160
    %196 = vmatprep.subr.mxu0 0.0
    %197 = vmatpush1.xpose.msra.mxu0 %v161
    %198 = vmatprep.subr.mxu0 0.0
    %199 = vmatpush1.xpose.msra.mxu0 %v162
    %200 = vmatprep.subr.mxu0 0.0
    %201 = vmatpush1.xpose.msra.mxu0 %v163
    %202 = vmatprep.subr.mxu0 0.0
    %203 = vmatpush1.xpose.msra.mxu0 %v164
    %204 = vmatprep.subr.mxu0 0.0
    %205 = vmatpush1.xpose.msra.mxu0 %v165
    %206 = vmatprep.subr.mxu0 0.0
    %207 = vmatpush1.xpose.msra.mxu0 %v166
    %208 = vmatprep.subr.mxu0 0.0
    %209 = vmatpush1.xpose.msra.mxu0 %v167
    %210 = vmatprep.subr.mxu0 0.0
    %211 = vmatpush1.xpose.msra.mxu0 %v168
    %212 = vmatprep.subr.mxu0 0.0
    %213 = vmatpush1.xpose.msra.mxu0 %v169
    %214 = vmatprep.subr.mxu0 0.0
    %215 = vmatpush1.xpose.msra.mxu0 %v170
    %216 = vmatprep.subr.mxu0 0.0
    %217 = vmatpush1.xpose.msra.mxu0 %v171
    %218 = vmatprep.subr.mxu0 0.0
    %219 = vmatpush1.xpose.msra.mxu0 %v172
    %220 = vmatprep.subr.mxu0 0.0
    %221 = vmatpush1.xpose.msra.mxu0 %v173
    %222 = vmatprep.subr.mxu0 0.0
    %223 = vmatpush1.xpose.msra.mxu0 %v174
    %224 = vmatprep.subr.mxu0 0.0
    %225 = vmatpush1.xpose.msra.mxu0 %v175
    %226 = vmatprep.subr.mxu0 0.0
    %227 = vmatpush1.xpose.msra.mxu0 %v176
    %228 = vmatprep.subr.mxu0 0.0
    %229 = vmatpush1.xpose.msra.mxu0 %v177
    %230 = vmatprep.subr.mxu0 0.0
    %231 = vmatpush1.xpose.msra.mxu0 %v178
    %232 = vmatprep.subr.mxu0 0.0
    %233 = vmatpush1.xpose.msra.mxu0 %v179
    %234 = vmatprep.subr.mxu0 0.0
    %235 = vmatpush1.xpose.msra.mxu0 %v180
    %236 = vmatprep.subr.mxu0 0.0
    %237 = vmatpush1.xpose.msra.mxu0 %v181
    %238 = vmatprep.subr.mxu0 0.0
    %239 = vmatpush1.xpose.msra.mxu0 %v182
    %240 = vmatprep.subr.mxu0 0.0
    %241 = vmatpush1.xpose.msra.mxu0 %v183
    %242 = vmatprep.subr.mxu0 0.0
    %243 = vmatpush1.xpose.msra.mxu0 %v184
    %244 = vmatprep.subr.mxu0 0.0
    %245 = vmatpush1.xpose.msra.mxu0 %v185
    %246 = vmatprep.subr.mxu0 0.0
    %247 = vmatpush1.xpose.msra.mxu0 %v186
    %248 = vmatprep.subr.mxu0 0.0
    %249 = vmatpush1.xpose.msra.mxu0 %v187
    %250 = vmatprep.subr.mxu0 0.0
    %251 = vmatpush1.xpose.msra.mxu0 %v188
    %252 = vmatprep.subr.mxu0 0.0
    %253 = vmatpush1.xpose.msra.mxu0 %v189
    %254 = vmatprep.mubr.f32.mxu0 0.0
    %255 = vmatmul.mubr.f32.gmra.mrb[0].mxu0 %v155
    %v256 = vpop.f32.mrb[0].mxu0
    %v257 = vadd.f32 0.0, %v256
    %v258 = vpop.f32.mrb[0].mxu0
    %v259 = vadd.f32 0.0, %v258
    %260 = vdwg.mxu0
    %v261 = vmax.f32 %v257, %v259
    %262 = vmax.xlane.f32.xlu0 %v261
    %v263 = vpop.xlane.xlu0 %262
    %v264 = vsub.f32 %v257, %v263
    %v265 = vsub.f32 %v259, %v263
    %v266 = vmul.f32 %v264, 1.442695
    %v267 = vpow.pop %v266
    %v268 = vmul.f32 %v265, 1.442695
    %v269 = vpow.pop %v268
    %v270 = vadd.f32 %v267, %v269
    %271 = vadd.xlane.f32.xlu0 %v270
    %v272 = vpop.xlane.xlu0 %271
    %v273 = vrcp.pop %v272
    %v274 = vmul.f32 %v267, %v273
    %v275 = vmul.f32 %v269, %v273
    %276 = vst [vmem:[#allocation8] sm:$0xff] %v274
    %277 = vst [vmem:[#allocation8 + $0x8] sm:$0xff] %v275
    // Predicated region
    $region26: #{tpu_custom_call.1} parent=1 // pred_check
      _
    $region27: #{tpu_custom_call.1} parent=1 // pred_check_branch
      %279 = sbr.rel (0) target = $region29
    $region28: #{tpu_custom_call.1} parent=1 // pred_region
      %s281 = ssub.s32 256, 256
      %282 = vsyncadd [#allocation4], %s281
      %s284 = sshll.u32 [#allocation8], 4
      %s285 = int_to_ptr.vmem [resolvable:$true] %s284
      %287 = dma.vmem_to_hbm [thread:$0]  %s285, 256, %s3, [#allocation4]
    $region29: #{tpu_custom_call.1} parent=1 // pred_fallthru
      _
    // Predicated region
    $region30: #{tpu_custom_call.1} parent=1 // pred_check
      _
    $region31: #{tpu_custom_call.1} parent=1 // pred_check_branch
      %289 = sbr.rel (0) target = $region33
    $region32: #{tpu_custom_call.1} parent=1 // pred_region
      %290 = dma.done [#allocation4], 256
    $region33: #{tpu_custom_call.1} parent=1 // pred_fallthru
      _
    %291 = vsyncpa [#allocation3], 1
    %292 = vsyncpa [#allocation6], 1
    %293 = vsyncpa [#allocation4], 1

</llo_original>
